<compile_context>
chip_gen: v6e
topology: v6e:2x2x1
jax: 0.10.0
libtpu: 0.0.40
codegen_flags: <defaults>
</compile_context>

<pallas_src>
import jax
import jax.numpy as jnp
from jax.experimental import pallas as pl
from jax.experimental.pallas import tpu as pltpu

_LANE = 128


def _round_up(x: int, m: int) -> int:
    return ((x + m - 1) // m) * m


def _sublane_tile(dtype) -> int:
    # Second-minor native tile height: f32 -> 8, bf16 -> 16, int8/fp8 -> 32.
    return max(8, 32 // jnp.dtype(dtype).itemsize)


def _vmem_capacity_bytes() -> int:
    """Per-TensorCore VMEM for this TPU generation.

    v4 / v5e / v5p / v6e: 128 MiB, v7x: 64 MiB.  Unknown chips fall back to
    the conservative 64 MiB so we never over-allocate VMEM.
    """
    try:
        kind = jax.devices()[0].device_kind.lower()
    except Exception:
        kind = ""
    if "v7" in kind:
        return 64 * 1024 * 1024
    if any(v in kind for v in ("v4", "v5", "v6")):
        return 128 * 1024 * 1024
    return 64 * 1024 * 1024


def additive_attention_kernel(x_ref, w1_ref, b1_ref, w2_ref, o_ref):
    # x_ref : (Bt, S, D)   w1_ref: (D, H)   b1_ref: (1, H)   w2_ref: (1, H)
    Bt, S, D = x_ref.shape
    H = w1_ref.shape[1]

    x3 = x_ref[...]                                    # native dtype, (Bt, S, D)

    # Fold batch and seq so the MXU sees one fat (Bt*S, D) @ (D, H) matmul
    # instead of Bt tiny M=S ones.  The minor dim (D) is unchanged and S is a
    # multiple of the sublane tile in the supported configs (8 for f32, 16 for
    # bf16), so this reshape is a free view — no VMEM relayout copy.
    x2d = x3.reshape(Bt * S, D)

    # hidden = tanh(x @ W1 + b1): MXU matmul with f32 accumulation, tanh on EUP.
    h = jnp.tanh(
        jnp.dot(x2d, w1_ref[...], preferred_element_type=jnp.float32)
        + b1_ref[...].astype(jnp.float32)
    ).reshape(Bt, S, H)                                # (Bt, S, H) f32

    # scores = hidden @ w2 (output width 1): VPU multiply + lane reduce over H
    # — avoids an N=1 MXU matmul that would waste the systolic array.
    w2 = w2_ref[...].astype(jnp.float32).reshape(1, 1, H)
    scores = jnp.sum(h * w2, axis=-1, keepdims=True)   # (Bt, S, 1) f32

    # Per-batch softmax over the sequence axis, numerically stabilized.  The
    # normalization divide is moved to the otherwise-idle EUP slot via the
    # approximate reciprocal.
    m = jnp.max(scores, axis=1, keepdims=True)         # (Bt, 1, 1)
    e = jnp.exp(scores - m)                            # (Bt, S, 1)
    denom = jnp.sum(e, axis=1, keepdims=True)          # (Bt, 1, 1)
    attn = e * pl.reciprocal(denom, approx=True)       # (Bt, S, 1) f32

    # Final rescale in the input dtype: only the tiny (Bt, S, 1) attention
    # tensor is cast, so there is no full-tile f32 upcast of x (halves VPU
    # work / vreg pressure for bf16 inputs on v6e/v7x and removes an f32 copy
    # of the largest tensor from VMEM).  For f32 inputs this is identical to
    # computing in f32.
    o_ref[...] = (x3 * attn.astype(x3.dtype)).astype(o_ref.dtype)


def _pick_block_b(B, S, D, H, x_dtype, vmem_cap):
    """Fold as many batches per grid step as the VMEM budget allows, while
    keeping enough grid steps for DMA/compute overlap (>=4 steps when B allows
    it, i.e. >=2 steps per TensorCore after megacore sharding on v7x)."""
    itemsize = jnp.dtype(x_dtype).itemsize
    sub = _sublane_tile(x_dtype)
    S_pad = _round_up(S, sub)            # sublane padding of the seq dim
    D_pad = _round_up(D, _LANE)          # lane padding (D < 128 pads 4x at D=32)
    H_pad = _round_up(H, _LANE)

    # ~60% of physical VMEM for what we account below; the rest is headroom
    # for Mosaic internal scratch, semaphores and alignment.
    budget = int(vmem_cap * 0.60)

    # VMEM-resident weights.  They use constant index_maps; the pipeline still
    # double-buffers them (pipeline_mode=pl.Buffered(1) would single-buffer
    # them, but the saving is tiny here), so account two copies.
    weight_bytes = 2 * (_round_up(D, sub) * H_pad + 2 * sub * H_pad) * itemsize

    # Per folded batch: double-buffered in/out blocks + the single-copy f32
    # hidden and the product value materialized ahead of the store — all with
    # lane/sublane padding included so we do not over-pick block_b.
    io_tile = S_pad * D_pad * itemsize
    per_batch = 2 * 2 * io_tile          # x block + out block, 2 buffers each
    per_batch += S_pad * H_pad * 4       # f32 tanh(x @ W1 + b1)
    per_batch += io_tile                 # x * attn value before the store
    max_by_vmem = max(1, (budget - weight_bytes) // per_batch)

    # >=4 grid steps when the batch allows it (pipelining on every generation;
    # >=2 steps per core on v7x).  The VMEM cap usually binds first for large
    # B·S·D, which is exactly what we want for this mem-bound kernel.
    min_steps = min(B, 4)
    max_by_steps = max(1, B // min_steps)

    return int(max(1, min(B, max_by_vmem, max_by_steps)))


def additive_attention(x, w1, b1, w2, *, block_b=None, vmem_limit_bytes=None):
    """x: (B, S, D), w1: (D, H), b1: (H,), w2: (H,)  ->  (B, S, D)

    Computes x * softmax_seq(tanh(x @ w1 + b1) @ w2), matching the PyTorch
    AdditiveAttention forward pass.
    """
    B, S, D = x.shape
    H = w1.shape[1]

    vmem_cap = _vmem_capacity_bytes()
    if block_b is None:
        block_b = _pick_block_b(B, S, D, H, x.dtype, vmem_cap)
    if vmem_limit_bytes is None:
        # Raise the scoped-VMEM limit well above the per-chip defaults
        # (16 MiB v5e / 32 MiB v6e+v7x) while staying below physical capacity.
        vmem_limit_bytes = int(vmem_cap * 0.85)

    b1_2d = b1.reshape(1, H)
    w2_2d = w2.reshape(1, H)

    # NOTE(perf): when D is not a multiple of 128 (e.g. D=32 here) the last
    # dim is lane-sparse (masked stores, 4x VMEM padding).  A lane-dense
    # (B, S*D) slab presentation would speed the load/store path further, but
    # it requires a minor-dim relayout inside the kernel to recover the
    # (Bt*S, D) matmul operand, so it is intentionally not done here.
    grid = (pl.cdiv(B, block_b),)
    return pl.pallas_call(
        additive_attention_kernel,
        out_shape=jax.ShapeDtypeStruct((B, S, D), x.dtype),
        grid_spec=pltpu.PrefetchScalarGridSpec(
            num_scalar_prefetch=0,
            grid=grid,
            in_specs=[
                pl.BlockSpec((block_b, S, D), lambda b: (b, 0, 0)),
                # constant index_maps: weights stay VMEM-resident across steps
                pl.BlockSpec((D, H), lambda b: (0, 0)),
                pl.BlockSpec((1, H), lambda b: (0, 0)),
                pl.BlockSpec((1, H), lambda b: (0, 0)),
            ],
            out_specs=pl.BlockSpec((block_b, S, D), lambda b: (b, 0, 0)),
        ),
        compiler_params=pltpu.CompilerParams(
            dimension_semantics=("parallel",),
            vmem_limit_bytes=vmem_limit_bytes,
        ),
    )(x, w1, b1_2d, w2_2d)


def xavier_uniform(key, shape, dtype=jnp.float32):
    fan_in, fan_out = shape[0], shape[1]
    limit = (6.0 / (fan_in + fan_out)) ** 0.5
    return jax.random.uniform(key, shape, dtype, minval=-limit, maxval=limit)


def additive_attention_ref(x, w1, b1, w2):
    h = jnp.tanh(x @ w1 + b1)                      # (B, S, H)
    scores = h @ w2.reshape(-1, 1)                 # (B, S, 1)
    attn = jax.nn.softmax(scores, axis=-2)         # softmax over seq
    return x * attn


if __name__ == "__main__":
    B, S, D, H = 2, 8, 32, 32

    key = jax.random.PRNGKey(0)
    k_x, k_w1, k_w2 = jax.random.split(key, 3)

    x = jax.random.normal(k_x, (B, S, D), dtype=jnp.float32)

    # nn.Linear(input_dim, hidden_dim): weight (H, D) xavier-uniform, bias 0.
    # Stored transposed (D, H) so the kernel computes x @ w1.
    w1 = xavier_uniform(k_w1, (H, D)).T            # (D, H)
    b1 = jnp.zeros((H,), dtype=jnp.float32)
    # nn.Linear(hidden_dim, 1, bias=False): weight (1, H) xavier -> store (H,).
    w2 = xavier_uniform(k_w2, (1, H)).reshape(H)

    out = additive_attention(x, w1, b1, w2)
    jax.block_until_ready(out)

    ref = additive_attention_ref(x, w1, b1, w2)
    assert out.shape == (B, S, D)
    # Tolerance relaxed vs exact f32 because the softmax normalization uses
    # the EUP approximate reciprocal.
    assert jnp.allclose(out, ref, atol=1e-3, rtol=1e-3), "mismatch vs reference"

    print("KERNEL_OK")
</pallas_src>

<mosaic_0001>
module attributes {stable_mosaic.version = 11 : i64} {
  func.func @additive_attention_kernel(%arg0: i32, %arg1: memref<1x8x32xf32, #tpu.memory_space<vmem>>, %arg2: memref<32x32xf32, #tpu.memory_space<vmem>>, %arg3: memref<1x32xf32, #tpu.memory_space<vmem>>, %arg4: memref<1x32xf32, #tpu.memory_space<vmem>>, %arg5: memref<1x8x32xf32, #tpu.memory_space<vmem>>) attributes {dimension_semantics = [#tpu.dimension_semantics<parallel>], iteration_bounds = array<i64: 2>, scalar_prefetch = 0 : i64, scratch_operands = 0 : i64, tpu.core_type = #tpu.core_type<tc>, window_params = [{transform_indices = @transform_0, window_bounds = array<i64: 1, 8, 32>}, {pipeline_mode = #tpu.pipeline_mode<synchronous>, transform_indices = @transform_1, window_bounds = array<i64: 32, 32>}, {pipeline_mode = #tpu.pipeline_mode<synchronous>, transform_indices = @transform_2, window_bounds = array<i64: 1, 32>}, {pipeline_mode = #tpu.pipeline_mode<synchronous>, transform_indices = @transform_3, window_bounds = array<i64: 1, 32>}, {transform_indices = @transform_4, window_bounds = array<i64: 1, 8, 32>}]} {
    %c0 = arith.constant 0 : index
    %c0_0 = arith.constant 0 : index
    %c0_1 = arith.constant 0 : index
    %0 = vector.load %arg1[%c0, %c0_0, %c0_1] : memref<1x8x32xf32, #tpu.memory_space<vmem>>, vector<1x8x32xf32>
    %1 = vector.shape_cast %0 : vector<1x8x32xf32> to vector<8x32xf32>
    %c0_2 = arith.constant 0 : index
    %c0_3 = arith.constant 0 : index
    %2 = vector.load %arg2[%c0_2, %c0_3] : memref<32x32xf32, #tpu.memory_space<vmem>>, vector<32x32xf32>
    %cst = arith.constant dense<0.000000e+00> : vector<8x32xf32>
    %3 = tpu.matmul %1, %2, %cst {dimension_numbers = #tpu.dot_dimension_numbers<[1], [0], [0], [1], [0, 0, 1, 1], [], []>} : vector<8x32xf32>, vector<32x32xf32>, vector<8x32xf32> -> vector<8x32xf32>
    %c0_4 = arith.constant 0 : index
    %c0_5 = arith.constant 0 : index
    %4 = vector.load %arg3[%c0_4, %c0_5] : memref<1x32xf32, #tpu.memory_space<vmem>>, vector<1x32xf32>
    %5 = vector.broadcast %4 : vector<1x32xf32> to vector<8x32xf32>
    %6 = arith.addf %3, %5 : vector<8x32xf32>
    %7 = math.tanh %6 : vector<8x32xf32>
    %8 = vector.shape_cast %7 : vector<8x32xf32> to vector<1x8x32xf32>
    %c0_6 = arith.constant 0 : index
    %c0_7 = arith.constant 0 : index
    %9 = vector.load %arg4[%c0_6, %c0_7] : memref<1x32xf32, #tpu.memory_space<vmem>>, vector<1x32xf32>
    %10 = vector.shape_cast %9 : vector<1x32xf32> to vector<1x1x32xf32>
    %11 = vector.broadcast %10 : vector<1x1x32xf32> to vector<1x8x32xf32>
    %12 = arith.mulf %8, %11 : vector<1x8x32xf32>
    %cst_8 = arith.constant dense<0.000000e+00> : vector<1x8xf32>
    %13 = vector.multi_reduction <add>, %12, %cst_8 [2] : vector<1x8x32xf32> to vector<1x8xf32>
    %14 = vector.shape_cast %13 : vector<1x8xf32> to vector<1x8x1xf32>
    %cst_9 = arith.constant dense<0xFF800000> : vector<1x1xf32>
    %15 = vector.multi_reduction <maximumf>, %14, %cst_9 [1] : vector<1x8x1xf32> to vector<1x1xf32>
    %16 = vector.shape_cast %15 : vector<1x1xf32> to vector<1x1x1xf32>
    %17 = vector.broadcast %16 : vector<1x1x1xf32> to vector<1x8x1xf32>
    %18 = arith.subf %14, %17 : vector<1x8x1xf32>
    %19 = math.exp %18 : vector<1x8x1xf32>
    %cst_10 = arith.constant dense<0.000000e+00> : vector<1x1xf32>
    %20 = vector.multi_reduction <add>, %19, %cst_10 [1] : vector<1x8x1xf32> to vector<1x1xf32>
    %21 = vector.shape_cast %20 : vector<1x1xf32> to vector<1x1x1xf32>
    %22 = tpu.reciprocal %21 {approx = true} : vector<1x1x1xf32> -> vector<1x1x1xf32>
    %23 = vector.broadcast %22 : vector<1x1x1xf32> to vector<1x8x1xf32>
    %24 = arith.mulf %19, %23 : vector<1x8x1xf32>
    %25 = vector.broadcast %24 : vector<1x8x1xf32> to vector<1x8x32xf32>
    %26 = arith.mulf %0, %25 : vector<1x8x32xf32>
    %c0_11 = arith.constant 0 : index
    %c0_12 = arith.constant 0 : index
    %c0_13 = arith.constant 0 : index
    %27 = vector.load %arg5[%c0_11, %c0_12, %c0_13] : memref<1x8x32xf32, #tpu.memory_space<vmem>>, vector<1x8x32xf32>
    tpu.vector_store %arg5[%c0_11, %c0_12, %c0_13], %26 {strides = array<i32>} : memref<1x8x32xf32, #tpu.memory_space<vmem>>, vector<1x8x32xf32>,
    return
  }
  func.func @transform_0(%arg0: i32) -> (i32, i32, i32) {
    %c0_i32 = arith.constant 0 : i32
    %c0_i32_0 = arith.constant 0 : i32
    %c0_i32_1 = arith.constant 0 : i32
    return %arg0, %c0_i32, %c0_i32_0 : i32, i32, i32
  }
  func.func @transform_1(%arg0: i32) -> (i32, i32) {
    %c0_i32 = arith.constant 0 : i32
    %c0_i32_0 = arith.constant 0 : i32
    %c0_i32_1 = arith.constant 0 : i32
    return %c0_i32, %c0_i32_0 : i32, i32
  }
  func.func @transform_2(%arg0: i32) -> (i32, i32) {
    %c0_i32 = arith.constant 0 : i32
    %c0_i32_0 = arith.constant 0 : i32
    %c0_i32_1 = arith.constant 0 : i32
    return %c0_i32, %c0_i32_0 : i32, i32
  }
  func.func @transform_3(%arg0: i32) -> (i32, i32) {
    %c0_i32 = arith.constant 0 : i32
    %c0_i32_0 = arith.constant 0 : i32
    %c0_i32_1 = arith.constant 0 : i32
    return %c0_i32, %c0_i32_0 : i32, i32
  }
  func.func @transform_4(%arg0: i32) -> (i32, i32, i32) {
    %c0_i32 = arith.constant 0 : i32
    %c0_i32_0 = arith.constant 0 : i32
    %c0_i32_1 = arith.constant 0 : i32
    return %arg0, %c0_i32, %c0_i32_0 : i32, i32, i32
  }
}

</mosaic_0001>

<llo_original>
// kernel: tpu_custom_call.1
$region0: #{tpu_custom_call.1}
  #allocation0 [shape = 'u32[]', space=smem, size = 0x4, offset = 0x4, fixed_abs, tag = 'smem constant byte address 0x4 - core index']
  #allocation1 [shape = 'u32[144,128]{1,0:T(1,128)}', space=vmem, size = 0x12000, scoped, tag = 'internal scratch']
  %s0 = inlined_call_operand.hbm [shape: f32[2,8,32], index: 0, kind: input, shape index: {}]
  %s1 = inlined_call_operand.hbm [shape: f32[32,32], index: 1, kind: input, shape index: {}]
  %s2 = inlined_call_operand.vmem [shape: f32[1,32], index: 2, kind: input, shape index: {}]
  %s3 = inlined_call_operand.vmem [shape: f32[1,32], index: 3, kind: input, shape index: {}]
  %s4 = inlined_call_operand.hbm [shape: f32[2,8,32], index: 4, kind: output, shape index: {}]
  %s5 = sld [smem:[#allocation0]]
  $region57: #{tpu_custom_call.1} parent=0
    _
  %s7 = ssub.s32 1, %s5
  %s8 = scalar_select 0, %s7, %s5
  $region1: #{tpu_custom_call.1} parent=0
    #allocation2 [shape = 'u8[8192]{0}', space=vmem, size = 0x2000, scoped, tag = 'input window, operand 0']
    #allocation3 [shape = 's32[2]{0}', space=sflag, size = 0x8, scoped, tag = 'scoped memory for tpu_custom_call.1']
    #allocation4 [shape = 's32[2]{0}', space=sflag, size = 0x8, scoped, tag = 'scoped memory for tpu_custom_call.1']
    #allocation5 [shape = 'u8[16384]{0}', space=vmem, size = 0x4000, scoped, tag = 'input window, operand 1, single buffered']
    #allocation6 [shape = 's32[1]{0}', space=sflag, size = 0x4, scoped, tag = 'scoped memory for tpu_custom_call.1']
    #allocation7 [shape = 'u8[8192]{0}', space=vmem, size = 0x2000, scoped, tag = 'output window, operand 0']
    %9 = vsyncpa [#allocation3], 0
    %s10 = scalar_lea.sflag [#allocation3], 1
    %11 = vsyncpa %s10, 0
    %12 = vsyncpa [#allocation6], 0
    %13 = vsyncpa [#allocation4], 0
    %s14 = scalar_lea.sflag [#allocation4], 1
    %15 = vsyncpa %s14, 0
    loop: start=0, step=1, limit=4
    $region2: #{tpu_custom_call.1} parent=1 // loop_pre_header
      _
    $region3: #{tpu_custom_call.1} parent=1 // loop_header
      %s17 = sphi 0, %s21
      %p18 = scmp.ge.s32.totalorder %s17, 4
      %s27 = sphi 0, %s29
      %s30 = sphi 0, %s27
      %s31 = sphi 0, %s30
      %s47 = sphi 0, %s31
      %s51 = sphi 0, %s51
      %s53 = sphi 0, %s51
      %s54 = sphi 0, %s53
      %s68 = sphi 0, %s54
      %s72 = sphi 0, %s72
      %s74 = sphi 0, %s72
      %s75 = sphi 0, %s74
      %s89 = sphi 0, %s75
      %s93 = sphi 0, %s93
      %s95 = sphi 0, %s93
      %s96 = sphi 0, %s95
      %s110 = sphi 0, %s96
      %s116 = sphi 0, %s118
      %s119 = sphi 0, %s116
      %s120 = sphi 0, %s119
      %s136 = sphi 0, %s120
    $region4: #{tpu_custom_call.1} parent=1 // loop_header_branch
      %20 = sbr.rel (%p18) target = $region8
    $region5: #{tpu_custom_call.1} parent=1 // loop_body
      %s22 = ssub.s32 %s17, 1
      %s23 = ssub.s32 %s17, 2
      %s24 = sadd.s32 %s17, 1
      %s25 = ssub.s32 %s17, %s24
      %p26 = scmp.eq.s32.totalorder %s25, 0
      %s28 = sadd.s32 %s27, 1
      %s29 = scalar_select %p26, %s27, %s28
      %p32 = pneg %p26
      %p33 = scmp.eq.s32.totalorder %s17, 1
      %p34 = por %p32, %p33
      %p35 = scmp.ne.s32.totalorder %s27, %s30
      %p36 = scmp.eq.s32.totalorder %s17, 0
      %p37 = por %p35, %p36
      %p38 = scmp.ne.s32.totalorder %s27, %s30
      %p39 = scmp.eq.s32.totalorder %s22, 1
      %p40 = por %p38, %p39
      %p41 = scmp.ne.s32.totalorder %s30, %s31
      %p42 = scmp.eq.s32.totalorder %s22, 0
      %p43 = por %p41, %p42
      %p44 = scmp.ne.s32.totalorder %s30, %s31
      %p45 = scmp.eq.s32.totalorder %s23, 1
      %p46 = por %p44, %p45
      %p48 = scmp.ne.s32.totalorder %s31, %s47
      %p49 = scmp.eq.s32.totalorder %s23, 0
      %p50 = por %p48, %p49
      %s52 = sadd.s32 %s51, 1
      %p55 = scmp.eq.s32.totalorder %s17, 1
      %p56 = scmp.ne.s32.totalorder %s51, %s53
      %p57 = scmp.eq.s32.totalorder %s17, 0
      %p58 = por %p56, %p57
      %p59 = scmp.ne.s32.totalorder %s51, %s53
      %p60 = scmp.eq.s32.totalorder %s22, 1
      %p61 = por %p59, %p60
      %p62 = scmp.ne.s32.totalorder %s53, %s54
      %p63 = scmp.eq.s32.totalorder %s22, 0
      %p64 = por %p62, %p63
      %p65 = scmp.ne.s32.totalorder %s53, %s54
      %p66 = scmp.eq.s32.totalorder %s23, 1
      %p67 = por %p65, %p66
      %p69 = scmp.ne.s32.totalorder %s54, %s68
      %p70 = scmp.eq.s32.totalorder %s23, 0
      %p71 = por %p69, %p70
      %s73 = sadd.s32 %s72, 1
      %p76 = scmp.eq.s32.totalorder %s17, 1
      %p77 = scmp.ne.s32.totalorder %s72, %s74
      %p78 = scmp.eq.s32.totalorder %s17, 0
      %p79 = por %p77, %p78
      %p80 = scmp.ne.s32.totalorder %s72, %s74
      %p81 = scmp.eq.s32.totalorder %s22, 1
      %p82 = por %p80, %p81
      %p83 = scmp.ne.s32.totalorder %s74, %s75
      %p84 = scmp.eq.s32.totalorder %s22, 0
      %p85 = por %p83, %p84
      %p86 = scmp.ne.s32.totalorder %s74, %s75
      %p87 = scmp.eq.s32.totalorder %s23, 1
      %p88 = por %p86, %p87
      %p90 = scmp.ne.s32.totalorder %s75, %s89
      %p91 = scmp.eq.s32.totalorder %s23, 0
      %p92 = por %p90, %p91
      %s94 = sadd.s32 %s93, 1
      %p97 = scmp.eq.s32.totalorder %s17, 1
      %p98 = scmp.ne.s32.totalorder %s93, %s95
      %p99 = scmp.eq.s32.totalorder %s17, 0
      %p100 = por %p98, %p99
      %p101 = scmp.ne.s32.totalorder %s93, %s95
      %p102 = scmp.eq.s32.totalorder %s22, 1
      %p103 = por %p101, %p102
      %p104 = scmp.ne.s32.totalorder %s95, %s96
      %p105 = scmp.eq.s32.totalorder %s22, 0
      %p106 = por %p104, %p105
      %p107 = scmp.ne.s32.totalorder %s95, %s96
      %p108 = scmp.eq.s32.totalorder %s23, 1
      %p109 = por %p107, %p108
      %p111 = scmp.ne.s32.totalorder %s96, %s110
      %p112 = scmp.eq.s32.totalorder %s23, 0
      %p113 = por %p111, %p112
      %s114 = ssub.s32 %s17, %s24
      %p115 = scmp.eq.s32.totalorder %s114, 0
      %s117 = sadd.s32 %s116, 1
      %s118 = scalar_select %p115, %s116, %s117
      %p121 = pneg %p115
      %p122 = scmp.eq.s32.totalorder %s17, 1
      %p123 = por %p121, %p122
      %p124 = scmp.ne.s32.totalorder %s116, %s119
      %p125 = scmp.eq.s32.totalorder %s17, 0
      %p126 = por %p124, %p125
      %p127 = scmp.ne.s32.totalorder %s116, %s119
      %p128 = scmp.eq.s32.totalorder %s22, 1
      %p129 = por %p127, %p128
      %p130 = scmp.ne.s32.totalorder %s119, %s120
      %p131 = scmp.eq.s32.totalorder %s22, 0
      %p132 = por %p130, %p131
      %p133 = scmp.ne.s32.totalorder %s119, %s120
      %p134 = scmp.eq.s32.totalorder %s23, 1
      %p135 = por %p133, %p134
      %p137 = scmp.ne.s32.totalorder %s120, %s136
      %p138 = scmp.eq.s32.totalorder %s23, 0
      %p139 = por %p137, %p138
      %p140 = scmp.le.s32.totalorder 1, %s17
      %p141 = scmp.lt.s32.totalorder %s17, 3
      %p142 = pnand %p140, %p141
      %p143 = pneg %p142
      // Predicated region
      $region9: #{tpu_custom_call.1} parent=5 // pred_check
        _
      $region10: #{tpu_custom_call.1} parent=5 // pred_check_branch
        %145 = sbr.rel (%p142) target = $region12
      $region11: #{tpu_custom_call.1} parent=5 // pred_region
        %s146 = ssub.s32 %s17, 1
        // Predicated region
        $region13: #{tpu_custom_call.1} parent=11 // pred_check
          %p147 = pneg %p64
        $region14: #{tpu_custom_call.1} parent=11 // pred_check_branch
          %149 = sbr.rel (%p147) target = $region16
        $region15: #{tpu_custom_call.1} parent=11 // pred_region
          %s151 = ssub.s32 512, 512
          %152 = vsyncadd [#allocation6], %s151
          %s153 = sshll.u32 [#allocation5], 4
          %s154 = int_to_ptr.vmem [resolvable:$true] %s153
          %159 = dma.hbm_to_vmem [thread:$0]  %s1, 512, %s154, [#allocation6], 128, 128, 8
        $region16: #{tpu_custom_call.1} parent=11 // pred_fallthru
          _
        // Predicated region
        $region17: #{tpu_custom_call.1} parent=11 // pred_check
          %p160 = pneg %p85
        $region18: #{tpu_custom_call.1} parent=11 // pred_check_branch
          %162 = sbr.rel (%p160) target = $region20
        $region19: #{tpu_custom_call.1} parent=11 // pred_region
          _
        $region20: #{tpu_custom_call.1} parent=11 // pred_fallthru
          _
        // Predicated region
        $region21: #{tpu_custom_call.1} parent=11 // pred_check
          %p163 = pneg %p106
        $region22: #{tpu_custom_call.1} parent=11 // pred_check_branch
          %165 = sbr.rel (%p163) target = $region24
        $region23: #{tpu_custom_call.1} parent=11 // pred_region
          _
        $region24: #{tpu_custom_call.1} parent=11 // pred_fallthru
          _
      $region12: #{tpu_custom_call.1} parent=5 // pred_fallthru
        _
      %p166 = scmp.lt.s32.totalorder %s17, 2
      // Predicated region
      $region25: #{tpu_custom_call.1} parent=5 // pred_check
        %p167 = pneg %p166
      $region26: #{tpu_custom_call.1} parent=5 // pred_check_branch
        %169 = sbr.rel (%p167) target = $region28
      $region27: #{tpu_custom_call.1} parent=5 // pred_region
        // Predicated region
        $region29: #{tpu_custom_call.1} parent=27 // pred_check
          %p170 = pneg %p37
        $region30: #{tpu_custom_call.1} parent=27 // pred_check_branch
          %172 = sbr.rel (%p170) target = $region32
        $region31: #{tpu_custom_call.1} parent=27 // pred_region
          %s173 = sand.u32 %s27, 1
          %s174 = scalar_lea.sflag [#allocation3], %s173
          %s175 = sand.u32 %s27, 1
          %s176 = smul.addr %s175, 8
          %s177 = scalar_lea.vmem [#allocation2], %s176
          %s179 = ssub.s32 128, 128
          %180 = vsyncadd %s174, %s179
          %s181 = smul.addr %s17, 128
          %s182 = scalar_lea.hbm %s0, %s181
          %s184 = sshll.u32 %s177, 4
          %s185 = int_to_ptr.vmem [resolvable:$true] %s184
          %187 = dma.hbm_to_vmem [thread:$0]  %s182, 128, %s185, %s174
        $region32: #{tpu_custom_call.1} parent=27 // pred_fallthru
          _
      $region28: #{tpu_custom_call.1} parent=5 // pred_fallthru
        _
      %p188 = scmp.le.s32.totalorder 1, %s17
      %p189 = scmp.lt.s32.totalorder %s17, 3
      %p190 = pnand %p188, %p189
      %p191 = pneg %p190
      // Predicated region
      $region33: #{tpu_custom_call.1} parent=5 // pred_check
        _
      $region34: #{tpu_custom_call.1} parent=5 // pred_check_branch
        %193 = sbr.rel (%p190) target = $region36
      $region35: #{tpu_custom_call.1} parent=5 // pred_region
        %s194 = ssub.s32 %s17, 1
        %s195 = sand.u32 %s30, 1
        %s196 = scalar_lea.sflag [#allocation3], %s195
        %s197 = sand.u32 %s30, 1
        %s198 = smul.addr %s197, 8
        %s199 = scalar_lea.vmem [#allocation2], %s198
        // Predicated region
        $region37: #{tpu_custom_call.1} parent=35 // pred_check
          %p200 = pneg %p43
        $region38: #{tpu_custom_call.1} parent=35 // pred_check_branch
          %202 = sbr.rel (%p200) target = $region40
        $region39: #{tpu_custom_call.1} parent=35 // pred_region
          %203 = dma.done %s196, 128
        $region40: #{tpu_custom_call.1} parent=35 // pred_fallthru
          _
        // Predicated region
        $region41: #{tpu_custom_call.1} parent=35 // pred_check
          %p204 = pneg %p64
        $region42: #{tpu_custom_call.1} parent=35 // pred_check_branch
          %206 = sbr.rel (%p204) target = $region44
        $region43: #{tpu_custom_call.1} parent=35 // pred_region
          %207 = dma.done [#allocation6], 512
        $region44: #{tpu_custom_call.1} parent=35 // pred_fallthru
          _
        %s208 = sand.u32 %s30, 1
        %s209 = scalar_lea.sflag [#allocation3], %s208
        %s210 = sand.u32 %s30, 1
        %s211 = smul.addr %s210, 8
        %s212 = scalar_lea.vmem [#allocation2], %s211
        %p213 = pneg %p43
        %p214 = pneg %p40
        %p215 = pneg %p64
        %p216 = pneg %p61
        %p217 = pneg %p85
        %p218 = pneg %p82
        %p219 = pneg %p106
        %p220 = pneg %p103
        %p221 = pneg %p132
        %p222 = pneg %p129
        %s223 = sand.u32 %s119, 1
        %s224 = scalar_lea.sflag [#allocation4], %s223
        %s225 = sand.u32 %s119, 1
        %s226 = smul.addr %s225, 8
        %s227 = scalar_lea.vmem [#allocation7], %s226
        %v228 = vld [vmem:[%s199] sm:$0xff]
        %v229 = vld [vmem:[#allocation5] sm:$0xff]
        %v230 = vld [vmem:[#allocation5 + $0x8] sm:$0xff]
        %v231 = vld [vmem:[#allocation5 + $0x10] sm:$0xff]
        %v232 = vld [vmem:[#allocation5 + $0x18] sm:$0xff]
        %v233 = vld [vmem:[%s2] sm:$0x1]
        %v235 = vlaneseq
        %v236 = vshrl.u32 %v235, 7
        %v237 = vsub.s32 0, %v236
        %v238 = vrot.slane %v233, %v237
        %vm240 = vcmask 261120
        %v242 = vsel %vm240, %v228, 0
        %244 = vmatprep.subr.mxu0 0.0
        %245 = vmatpush1.msra.mxu0 0.0
        %246 = vmatprep.subr.mxu0 0.0
        %247 = vmatpush1.msra.mxu0 0.0
        %248 = vmatprep.subr.mxu0 0.0
        %249 = vmatpush1.msra.mxu0 0.0
        %250 = vmatprep.subr.mxu0 0.0
        %251 = vmatpush1.msra.mxu0 0.0
        %252 = vmatprep.subr.mxu0 0.0
        %253 = vmatpush1.msra.mxu0 0.0
        %254 = vmatprep.subr.mxu0 0.0
        %255 = vmatpush1.msra.mxu0 0.0
        %256 = vmatprep.subr.mxu0 0.0
        %257 = vmatpush1.msra.mxu0 0.0
        %258 = vmatprep.subr.mxu0 0.0
        %259 = vmatpush1.msra.mxu0 0.0
        %260 = vmatprep.subr.mxu0 0.0
        %261 = vmatpush1.msra.mxu0 0.0
        %262 = vmatprep.subr.mxu0 0.0
        %263 = vmatpush1.msra.mxu0 0.0
        %264 = vmatprep.subr.mxu0 0.0
        %265 = vmatpush1.msra.mxu0 0.0
        %266 = vmatprep.subr.mxu0 0.0
        %267 = vmatpush1.msra.mxu0 0.0
        %268 = vmatprep.subr.mxu0 0.0
        %269 = vmatpush1.msra.mxu0 %v232
        %270 = vmatprep.subr.mxu0 0.0
        %271 = vmatpush1.msra.mxu0 %v231
        %272 = vmatprep.subr.mxu0 0.0
        %273 = vmatpush1.msra.mxu0 %v230
        %274 = vmatprep.subr.mxu0 0.0
        %275 = vmatpush1.msra.mxu0 %v229
        %276 = vmatprep.subr.mxu0 0.0
        %277 = vmatpush2.msra.mxu0 0.0
        %278 = vmatprep.subr.mxu0 0.0
        %279 = vmatpush2.msra.mxu0 0.0
        %280 = vmatprep.subr.mxu0 0.0
        %281 = vmatpush2.msra.mxu0 0.0
        %282 = vmatprep.subr.mxu0 0.0
        %283 = vmatpush2.msra.mxu0 0.0
        %284 = vmatprep.subr.mxu0 0.0
        %285 = vmatpush2.msra.mxu0 0.0
        %286 = vmatprep.subr.mxu0 0.0
        %287 = vmatpush2.msra.mxu0 0.0
        %288 = vmatprep.subr.mxu0 0.0
        %289 = vmatpush2.msra.mxu0 0.0
        %290 = vmatprep.subr.mxu0 0.0
        %291 = vmatpush2.msra.mxu0 0.0
        %292 = vmatprep.subr.mxu0 0.0
        %293 = vmatpush2.msra.mxu0 0.0
        %294 = vmatprep.subr.mxu0 0.0
        %295 = vmatpush2.msra.mxu0 0.0
        %296 = vmatprep.subr.mxu0 0.0
        %297 = vmatpush2.msra.mxu0 0.0
        %298 = vmatprep.subr.mxu0 0.0
        %299 = vmatpush2.msra.mxu0 0.0
        %300 = vmatprep.subr.mxu0 0.0
        %301 = vmatpush2.msra.mxu0 0.0
        %302 = vmatprep.subr.mxu0 0.0
        %303 = vmatpush2.msra.mxu0 0.0
        %304 = vmatprep.subr.mxu0 0.0
        %305 = vmatpush2.msra.mxu0 0.0
        %306 = vmatprep.subr.mxu0 0.0
        %307 = vmatpush2.msra.mxu0 0.0
        %308 = vmatprep.mubr.f32.mxu0 0.0
        %309 = vmatmul.mubr.f32.gmra.mxu0 %v242
        %v310 = vpop.f32.mrf.mxu0
        %v311 = vadd.f32 %v238, %v310
        %v312 = vpop.f32.mrf.mxu0
        %313 = vdwg.mxu0
        %v314 = vtanh.pop %v311
        %v315 = vld [vmem:[%s3] sm:$0x1]
        %v317 = vlaneseq
        %v318 = vshrl.u32 %v317, 7
        %v319 = vsub.s32 0, %v318
        %v320 = vrot.slane %v315, %v319
        %v322 = vmul.f32 %v314, %v320
        %v323 = vsel %vm240, %v322, 0.0
        %324 = vadd.xlane.f32.xlu0 %v323
        %v325 = vpop.xlane.xlu0 %324
        %v326 = vrot.slane %v325, 4
        %v327 = vmax.f32 %v325, %v326
        %v328 = vrot.slane %v327, 2
        %v329 = vmax.f32 %v327, %v328
        %v330 = vrot.slane %v329, 1
        %v331 = vmax.f32 %v329, %v330
        %v332 = vsub.f32 %v325, %v331
        %v333 = vmul.f32 %v332, 1.442695
        %v334 = vpow.pop %v333
        %v335 = vrot.slane %v334, 4
        %v336 = vadd.f32 %v334, %v335
        %v337 = vrot.slane %v336, 2
        %v338 = vadd.f32 %v336, %v337
        %v339 = vrot.slane %v338, 1
        %v340 = vadd.f32 %v338, %v339
        %v341 = vrcp.pop %v340
        %v342 = vmul.f32 %v334, %v341
        %v343 = vmul.f32 %v228, %v342
        %344 = vst.msk [vmem:[%s227] sm:$0xff] %vm240, %v343
        %s345 = sand.u32 %s119, 1
        %s346 = scalar_lea.sflag [#allocation4], %s345
        %s347 = sand.u32 %s119, 1
        %s348 = smul.addr %s347, 8
        %s349 = scalar_lea.vmem [#allocation7], %s348
        // Predicated region
        $region45: #{tpu_custom_call.1} parent=35 // pred_check
          %p350 = pneg %p129
        $region46: #{tpu_custom_call.1} parent=35 // pred_check_branch
          %352 = sbr.rel (%p350) target = $region48
        $region47: #{tpu_custom_call.1} parent=35 // pred_region
          %s354 = ssub.s32 128, 128
          %355 = vsyncadd %s346, %s354
          %s356 = smul.addr %s22, 128
          %s357 = scalar_lea.hbm %s4, %s356
          %s359 = sshll.u32 %s349, 4
          %s360 = int_to_ptr.vmem [resolvable:$true] %s359
          %362 = dma.vmem_to_hbm [thread:$0]  %s360, 128, %s357, %s346
        $region48: #{tpu_custom_call.1} parent=35 // pred_fallthru
          _
      $region36: #{tpu_custom_call.1} parent=5 // pred_fallthru
        _
      %p363 = scmp.le.s32.totalorder 2, %s17
      // Predicated region
      $region49: #{tpu_custom_call.1} parent=5 // pred_check
        %p364 = pneg %p363
      $region50: #{tpu_custom_call.1} parent=5 // pred_check_branch
        %366 = sbr.rel (%p364) target = $region52
      $region51: #{tpu_custom_call.1} parent=5 // pred_region
        %s367 = ssub.s32 %s17, 2
        // Predicated region
        $region53: #{tpu_custom_call.1} parent=51 // pred_check
          %p368 = pneg %p135
        $region54: #{tpu_custom_call.1} parent=51 // pred_check_branch
          %370 = sbr.rel (%p368) target = $region56
        $region55: #{tpu_custom_call.1} parent=51 // pred_region
          %s371 = sand.u32 %s120, 1
          %s372 = scalar_lea.sflag [#allocation4], %s371
          %s373 = sand.u32 %s120, 1
          %s374 = smul.addr %s373, 8
          %s375 = scalar_lea.vmem [#allocation7], %s374
          %376 = dma.done %s372, 128
        $region56: #{tpu_custom_call.1} parent=51 // pred_fallthru
          _
      $region52: #{tpu_custom_call.1} parent=5 // pred_fallthru
        _
    $region6: #{tpu_custom_call.1} parent=1 // loop_footer
      %s21 = sadd.s32 1, %s17
    $region7: #{tpu_custom_call.1} parent=1 // loop_footer_branch
      %16 = sbr.rel target = $region3
    $region8: #{tpu_custom_call.1} parent=1 // loop_exit
      _
    %377 = vsyncpa [#allocation3], 1
    %s378 = scalar_lea.sflag [#allocation3], 1
    %379 = vsyncpa %s378, 1
    %380 = vsyncpa [#allocation6], 1
    %381 = vsyncpa [#allocation4], 1
    %s382 = scalar_lea.sflag [#allocation4], 1
    %383 = vsyncpa %s382, 1

</llo_original>
